<compile_context>
chip_gen: v5e
topology: v5e:2x2
jax: 0.10.0
libtpu: 0.0.40
codegen_flags: <defaults>
</compile_context>

<pallas_src>
import math
from functools import partial

import jax
import jax.numpy as jnp
from jax.experimental import pallas as pl
from jax.experimental.pallas import tpu as pltpu


_MAX_DMA_CHUNKS = 8            # concurrent chunk DMAs (uses multiple DMA queues)
_MIN_CHUNK_BYTES = 512 << 10   # don't split below ~0.5 MiB per DMA descriptor


def _dma_copy_kernel(x_hbm, o_hbm, sems, *, chunks):
    """Direct HBM->HBM copy of x into o via async DMA (no VMEM staging).

    `chunks` is a static tuple of (row_start, row_size) along the leading dim;
    an empty tuple means a single full-ref copy (used for shapes that do not
    re-block to a lane-dense 2-D slab).
    """
    if not chunks:
        copies = [pltpu.make_async_copy(x_hbm, o_hbm, sems.at[0])]
    else:
        copies = [
            pltpu.make_async_copy(
                x_hbm.at[pl.ds(start, size), :],
                o_hbm.at[pl.ds(start, size), :],
                sems.at[i],
            )
            for i, (start, size) in enumerate(chunks)
        ]
    # Issue every chunk first (they can overlap on the DMA engines), then wait.
    for cp in copies:
        cp.start()
    for cp in copies:
        cp.wait()


def _choose_2d_layout(total: int):
    """Largest lane-dense (rows, cols) re-blocking, or None if not 128-divisible."""
    for cols in (16384, 8192, 4096, 2048, 1024, 512, 256, 128):
        if total % cols == 0:
            return total // cols, cols
    return None


def _choose_chunks(rows: int, cols: int, itemsize: int):
    """Split rows into a few statically-sized DMA chunks."""
    row_bytes = cols * itemsize
    sub = max(8, 32 // itemsize)  # sublane packing granularity (f32:8, bf16:16, int8:32)
    max_by_size = max(1, (rows * row_bytes) // _MIN_CHUNK_BYTES)
    n = int(min(_MAX_DMA_CHUNKS, max_by_size, rows))
    chunk = pl.cdiv(rows, n)
    chunk = ((chunk + sub - 1) // sub) * sub  # align chunk starts to sublane granularity
    chunks = []
    start = 0
    while start < rows:
        size = min(chunk, rows - start)
        chunks.append((start, size))
        start += size
    return tuple(chunks)


def _materialize_copy(x: jax.Array) -> jax.Array:
    """Return a freshly materialized HBM copy of x (same shape, same dtype)."""
    total = int(math.prod(x.shape)) if x.ndim else 1
    itemsize = jnp.dtype(x.dtype).itemsize

    layout = _choose_2d_layout(total)
    if layout is None:
        # Element count not a multiple of 128: copy the flat 1-D array with a
        # single full-ref DMA.  Still a real copy -- no silent metadata fallback.
        arr = x.reshape(total)
        chunks = ()
    else:
        rows, cols = layout
        arr = x.reshape(rows, cols)          # metadata-only re-block, lane-dense rows
        chunks = _choose_chunks(rows, cols, itemsize)

    n_sems = max(1, len(chunks))
    out = pl.pallas_call(
        partial(_dma_copy_kernel, chunks=chunks),
        out_shape=jax.ShapeDtypeStruct(arr.shape, arr.dtype),
        in_specs=[pl.BlockSpec(memory_space=pl.ANY)],     # raw HBM ref
        out_specs=pl.BlockSpec(memory_space=pl.ANY),      # raw HBM ref (distinct buffer)
        scratch_shapes=[pltpu.SemaphoreType.DMA((n_sems,))],
    )(arr)
    return out


def pallas_view(x: jax.Array, view_shape: tuple[int, ...], *, force_kernel: bool = False) -> jax.Array:
    """Equivalent of torch View(view_shape).forward(x)."""
    batch_dims = x.shape[:-1] if x.ndim else ()
    last = x.shape[-1] if x.ndim else 1
    if math.prod(view_shape) != last:
        raise ValueError(
            f"prod(view_shape)={math.prod(view_shape)} must equal last dim {last}"
        )
    out_shape = (*batch_dims, *view_shape)

    if not force_kernel:
        # torch .view() never copies; neither do we. Zero HBM traffic.
        return x.reshape(out_shape)

    # Forced materialized copy: direct HBM->HBM chunked DMA, then metadata reshape.
    return _materialize_copy(x).reshape(out_shape)


if __name__ == "__main__":
    key = jax.random.PRNGKey(0)
    k1, k2, k3 = jax.random.split(key, 3)

    view_shape = (4, 16, 16)

    # Example 1: matches the PyTorch module spec at small scale.
    # x: (2, 1024); View((4, 16, 16)) -> (2, 4, 16, 16).
    x_small = jax.random.normal(k1, (2, 4 * 16 * 16), dtype=jnp.float32)
    ref_small = x_small.reshape(2, 4, 16, 16)

    out_fast = jax.block_until_ready(pallas_view(x_small, view_shape))
    out_kern = jax.block_until_ready(pallas_view(x_small, view_shape, force_kernel=True))
    assert out_fast.shape == (2, 4, 16, 16) and out_fast.dtype == x_small.dtype
    assert bool(jnp.array_equal(out_fast, ref_small))
    assert out_kern.shape == (2, 4, 16, 16) and out_kern.dtype == x_small.dtype
    assert bool(jnp.array_equal(out_kern, ref_small))

    # Example 2: 4 MiB forced copy -> re-blocked to (64, 16384) f32 and copied
    # with 8 concurrent 512 KiB HBM->HBM chunk DMAs (no VMEM staging).
    x_big = jax.random.normal(k2, (32, 32, 4 * 16 * 16), dtype=jnp.float32)
    ref_big = x_big.reshape(32, 32, 4, 16, 16)

    out_big = jax.block_until_ready(pallas_view(x_big, view_shape, force_kernel=True))
    assert out_big.shape == (32, 32, 4, 16, 16) and out_big.dtype == x_big.dtype
    assert bool(jnp.array_equal(out_big, ref_big))

    # Example 3: element count NOT a multiple of 128 -> forced copy still
    # materializes via a single full-ref 1-D HBM->HBM DMA (no silent fallback).
    x_odd = jax.random.normal(k3, (3, 255), dtype=jnp.float32)
    ref_odd = x_odd.reshape(3, 5, 51)
    out_odd = jax.block_until_ready(pallas_view(x_odd, (5, 51), force_kernel=True))
    assert out_odd.shape == (3, 5, 51) and out_odd.dtype == x_odd.dtype
    assert bool(jnp.array_equal(out_odd, ref_odd))

    print("KERNEL_OK")
</pallas_src>

<mosaic_0001>
module attributes {stable_mosaic.version = 11 : i64} {
  func.func @_dma_copy_kernel(%arg0: memref<1x2048xf32, #tpu.memory_space<any>>, %arg1: memref<1x2048xf32, #tpu.memory_space<any>>, %arg2: memref<1x!tpu.dma_semaphore, #tpu.memory_space<semaphore_mem>>) attributes {dimension_semantics = [], scalar_prefetch = 0 : i64, scratch_operands = 1 : i64, tpu.core_type = #tpu.core_type<tc>} {
    %c0_i32 = arith.constant 0 : i32
    %c0_i32_0 = arith.constant 0 : i32
    %c0_i32_1 = arith.constant 0 : i32
    %0 = tpu.memref_slice %arg0[%c0_i32_0, %c0_i32_1] : memref<1x2048xf32, #tpu.memory_space<any>> -> memref<1x2048xf32, #tpu.memory_space<any>>
    %c0_i32_2 = arith.constant 0 : i32
    %c0_i32_3 = arith.constant 0 : i32
    %1 = tpu.memref_slice %arg1[%c0_i32_2, %c0_i32_3] : memref<1x2048xf32, #tpu.memory_space<any>> -> memref<1x2048xf32, #tpu.memory_space<any>>
    %2 = tpu.memref_slice %arg2[%c0_i32] : memref<1x!tpu.dma_semaphore, #tpu.memory_space<semaphore_mem>> -> memref<1x!tpu.dma_semaphore, #tpu.memory_space<semaphore_mem>>
    %3 = tpu.memref_squeeze %2 : memref<1x!tpu.dma_semaphore, #tpu.memory_space<semaphore_mem>> -> memref<!tpu.dma_semaphore, #tpu.memory_space<semaphore_mem>>
    tpu.enqueue_dma source(%0 : memref<1x2048xf32, #tpu.memory_space<any>>) target(%1 : memref<1x2048xf32, #tpu.memory_space<any>>) target_semaphore(%3 : memref<!tpu.dma_semaphore, #tpu.memory_space<semaphore_mem>>)
    %c0_i32_4 = arith.constant 0 : i32
    %c0_i32_5 = arith.constant 0 : i32
    %c0_i32_6 = arith.constant 0 : i32
    %4 = tpu.memref_slice %arg0[%c0_i32_5, %c0_i32_6] : memref<1x2048xf32, #tpu.memory_space<any>> -> memref<1x2048xf32, #tpu.memory_space<any>>
    %c0_i32_7 = arith.constant 0 : i32
    %c0_i32_8 = arith.constant 0 : i32
    %5 = tpu.memref_slice %arg1[%c0_i32_7, %c0_i32_8] : memref<1x2048xf32, #tpu.memory_space<any>> -> memref<1x2048xf32, #tpu.memory_space<any>>
    %6 = tpu.memref_slice %arg2[%c0_i32_4] : memref<1x!tpu.dma_semaphore, #tpu.memory_space<semaphore_mem>> -> memref<1x!tpu.dma_semaphore, #tpu.memory_space<semaphore_mem>>
    %7 = tpu.memref_squeeze %6 : memref<1x!tpu.dma_semaphore, #tpu.memory_space<semaphore_mem>> -> memref<!tpu.dma_semaphore, #tpu.memory_space<semaphore_mem>>
    tpu.wait_dma2 semaphore(%7 : memref<!tpu.dma_semaphore, #tpu.memory_space<semaphore_mem>>) src(%4 : memref<1x2048xf32, #tpu.memory_space<any>>) dst(%5 : memref<1x2048xf32, #tpu.memory_space<any>>)
    return
  }
}

</mosaic_0001>

<llo_original>
// kernel: tpu_custom_call.1
$region0: #{tpu_custom_call.1}
  #allocation0 [shape = 'u32[]', space=smem, size = 0x4, offset = 0x4, fixed_abs, tag = 'smem constant byte address 0x4 - core index']
  #allocation1 [shape = 'u32[72,128]{1,0:T(1,128)}', space=vmem, size = 0x9000, scoped, tag = 'internal scratch']
  #allocation2 [shape = 's32[1]{0}', space=sflag, size = 0x4, scoped, tag = 'scratch operand']
  #allocation3 [shape = 's32[]', space=sflag, size = 0x4, offset = 0, fixed_abs, tag = 'sflag constant byte address 0x0 - dummy sync flag']
  #allocation4 [shape = 'u32[0]{0}', space=smem, size = 0, offset = 0, fixed_abs, tag = 'smem constant byte address 0x0 - null']
  %s0 = inlined_call_operand.hbm [shape: f32[1,2048], index: 0, kind: input, shape index: {}]
  %s1 = inlined_call_operand.hbm [shape: f32[1,2048], index: 1, kind: output, shape index: {}]
  %s2 = sld [smem:[#allocation0]]
  $region2: #{tpu_custom_call.1} parent=0
    _
  %s4 = ssub.s32 1, %s2
  %s5 = scalar_select 0, %s4, %s2
  %s7 = sshll.u32 1, 14
  %s8 = sxor.u32 4294967295, %s7
  %s10 = sshll.u32 %s0, 4
  %s11 = int_to_ptr.hbm [resolvable:$true] %s10
  %s12 = sshll.u32 %s1, 4
  %s13 = int_to_ptr.hbm [resolvable:$true] %s12
  %16 = dma.general %s11, 256, %s13, [#allocation2], [#allocation3], [#allocation4], 0, 0
  %s17 = smul.u32 1, 16
  %s18 = sshll.u32 %s17, 4
  %19 = dma.done [#allocation2], %s18
  %20 = vsyncmov [#allocation2]
  %s21 = vpop.sfrf %20
  %p22 = scmp.eq.s32.totalorder %s21, 0
  %p23 = pneg %p22
  %25 = shalt.err (%p23)

</llo_original>
